<compile_context>
chip_gen: v6e
topology: v6e:2x2x1
jax: 0.10.0
libtpu: 0.0.40
codegen_flags: <defaults>
</compile_context>

<pallas_src>
import functools

import jax
import jax.numpy as jnp
from jax import lax
from jax.experimental import pallas as pl
from jax.experimental.pallas import tpu as pltpu


def _round_up(n, m):
    return ((n + m - 1) // m) * m


def _affine_rk4_kernel(x_ref, u_ref, p_ref, a_ref, bm_ref, o_ref, *, num_steps):
    """num_steps fused RK4 steps of the affine system, fully VMEM-resident.

    x_{t+1} = x_t @ A + (u + p) @ Bm
    """
    # Hoisted once per tile (not per step, not per stage):
    c = u_ref[...] + p_ref[...]                                   # (TB, Dp)
    cb = jnp.dot(c, bm_ref[...], preferred_element_type=jnp.float32)
    a = a_ref[...]                                                # (Dp, Dp), resident

    def body(_, x):
        # single MXU matmul + VPU add per fused step
        return jnp.dot(x, a, preferred_element_type=jnp.float32) + cb

    x = lax.fori_loop(0, num_steps, body, x_ref[...].astype(jnp.float32),
                      unroll=(num_steps <= 8))
    o_ref[...] = x.astype(o_ref.dtype)


@functools.partial(jax.jit, static_argnames=("num_steps",))
def rk4_affine_steps(x, u, p, A, Bm, *, num_steps=1):
    """Pallas wrapper: pad to lane-dense shapes, tile batch, run fused steps."""
    B, D = x.shape
    Dp = _round_up(D, 128)            # lane-dense last dim (unmasked vst, full MXU width)
    Bpad = _round_up(B, 8)            # f32 sublane multiple
    if Bpad > 256:
        TB = 256                      # batch tile: stream x/u, double-buffered
        Bpad = _round_up(Bpad, TB)
    else:
        TB = Bpad

    f32 = jnp.float32
    xp = jnp.pad(x.astype(f32), ((0, Bpad - B), (0, Dp - D)))
    up = jnp.pad(u.astype(f32), ((0, Bpad - B), (0, Dp - D)))
    pp = jnp.pad(p.astype(f32), ((0, 0), (0, Dp - D)))            # keep p explicitly 2-D
    Ap = jnp.pad(A.astype(f32), ((0, Dp - D), (0, Dp - D)))       # zero-pad is exact:
    Bmp = jnp.pad(Bm.astype(f32), ((0, Dp - D), (0, Dp - D)))     # padded lanes stay 0

    grid = (Bpad // TB,)
    kernel = functools.partial(_affine_rk4_kernel, num_steps=num_steps)

    flops = int(2 * Bpad * Dp * Dp * (num_steps + 1) + 2 * Bpad * Dp * (num_steps + 1))
    bytes_accessed = int(4 * (2 * Bpad * Dp + Dp + 2 * Dp * Dp + Bpad * Dp))

    out = pl.pallas_call(
        kernel,
        out_shape=jax.ShapeDtypeStruct((Bpad, Dp), x.dtype),
        grid=grid,
        in_specs=[
            pl.BlockSpec((TB, Dp), lambda i: (i, 0)),   # x tile (streams over batch)
            pl.BlockSpec((TB, Dp), lambda i: (i, 0)),   # u tile
            pl.BlockSpec((1, Dp), lambda i: (0, 0)),    # p, replicated
            pl.BlockSpec((Dp, Dp), lambda i: (0, 0)),   # A, resident across grid
            pl.BlockSpec((Dp, Dp), lambda i: (0, 0)),   # Bm, resident across grid
        ],
        out_specs=pl.BlockSpec((TB, Dp), lambda i: (i, 0)),
        compiler_params=pltpu.CompilerParams(
            dimension_semantics=("parallel",)),         # megacore-shardable batch axis
        cost_estimate=pl.CostEstimate(flops=flops, transcendentals=0,
                                      bytes_accessed=bytes_accessed),
    )(xp, up, pp, Ap, Bmp)
    return out[:B, :D]


class CDCalc:
    """JAX/Pallas port of CD_calc: std_input[1] <- runge_kutta(std_input)."""

    def __init__(self, dim, delta_t, key):
        self.dim = dim
        self.delta_t = float(delta_t)
        kw, kp = jax.random.split(key)
        # deterministic synthetic "system": small stable-ish matrix + parameter row
        self.W = (jax.random.normal(kw, (dim, dim), dtype=jnp.float32)
                  * (0.1 / jnp.sqrt(dim)))
        self.param = jax.random.normal(kp, (1, dim), dtype=jnp.float32) * 0.01

        # Precompute the exact single-step RK4 propagators for affine f:
        #   x_{t+1} = x_t @ A + (u + p) @ Bm
        M = self.delta_t * self.W
        I = jnp.eye(dim, dtype=jnp.float32)
        M2 = M @ M
        M3 = M2 @ M
        M4 = M3 @ M
        self.A = I + M + M2 / 2.0 + M3 / 6.0 + M4 / 24.0
        self.Bm = self.delta_t * (I + M / 2.0 + M2 / 6.0 + M3 / 24.0)
        # NOTE(v7x/large-D): for big dim, store W/A/Bm in bf16 and raise
        # vmem_limit_bytes via pltpu.CompilerParams before scaling.

    def __call__(self, std_input, num_steps=1):
        # std_input: [drive/input (B,D), state (B,D)].  num_steps=1 matches the
        # original CD_calc.forward; num_steps>1 fuses the outer time loop into
        # one kernel launch (state never leaves VMEM between steps).
        u, x = std_input[0], std_input[1]
        x_next = rk4_affine_steps(x, u, self.param, self.A, self.Bm,
                                  num_steps=num_steps)
        out = list(std_input)   # JAX arrays are immutable; return updated list
        out[1] = x_next
        return out


if __name__ == "__main__":
    key = jax.random.PRNGKey(0)
    k_mod, k_u, k_x = jax.random.split(key, 3)

    B, D = 8, 32          # small batch of trajectories, dim-32 state
    delta_t = 0.01

    module = CDCalc(dim=D, delta_t=delta_t, key=k_mod)

    drive = jax.random.normal(k_u, (B, D), dtype=jnp.float32)
    state = jax.random.normal(k_x, (B, D), dtype=jnp.float32)
    std_input = [drive, state]

    # --- single step (matches CD_calc.forward semantics) ---
    std_output = module(std_input)
    new_state = jax.block_until_ready(std_output[1])

    # pure-JAX 4-stage RK4 reference
    def f_ref(y):
        return y @ module.W + drive + module.param

    def rk4_ref(y):
        k1 = f_ref(y)
        k2 = f_ref(y + 0.5 * delta_t * k1)
        k3 = f_ref(y + 0.5 * delta_t * k2)
        k4 = f_ref(y + delta_t * k3)
        return y + (delta_t / 6.0) * (k1 + 2 * k2 + 2 * k3 + k4)

    ref = rk4_ref(state)
    assert new_state.shape == (B, D) and new_state.dtype == jnp.float32
    assert jnp.allclose(new_state, ref, atol=1e-5, rtol=1e-5)

    # --- fused multi-step path (time loop inside the kernel) ---
    n_steps = 4
    fused = jax.block_until_ready(module(std_input, num_steps=n_steps)[1])
    ref_multi = state
    for _ in range(n_steps):
        ref_multi = rk4_ref(ref_multi)
    assert jnp.allclose(fused, ref_multi, atol=1e-5, rtol=1e-5)

    print("KERNEL_OK")
</pallas_src>

<mosaic_0001>
module attributes {stable_mosaic.version = 11 : i64} {
  func.func @_affine_rk4_kernel(%arg0: i32, %arg1: memref<8x128xf32, #tpu.memory_space<vmem>>, %arg2: memref<8x128xf32, #tpu.memory_space<vmem>>, %arg3: memref<1x128xf32, #tpu.memory_space<vmem>>, %arg4: memref<128x128xf32, #tpu.memory_space<vmem>>, %arg5: memref<128x128xf32, #tpu.memory_space<vmem>>, %arg6: memref<8x128xf32, #tpu.memory_space<vmem>>) attributes {dimension_semantics = [#tpu.dimension_semantics<parallel>], iteration_bounds = array<i64: 1>, scalar_prefetch = 0 : i64, scratch_operands = 0 : i64, tpu.core_type = #tpu.core_type<tc>, window_params = [{transform_indices = @transform_0, window_bounds = array<i64: 8, 128>}, {transform_indices = @transform_1, window_bounds = array<i64: 8, 128>}, {pipeline_mode = #tpu.pipeline_mode<synchronous>, transform_indices = @transform_2, window_bounds = array<i64: 1, 128>}, {pipeline_mode = #tpu.pipeline_mode<synchronous>, transform_indices = @transform_3, window_bounds = array<i64: 128, 128>}, {pipeline_mode = #tpu.pipeline_mode<synchronous>, transform_indices = @transform_4, window_bounds = array<i64: 128, 128>}, {transform_indices = @transform_5, window_bounds = array<i64: 8, 128>}]} {
    %c0 = arith.constant 0 : index
    %c0_0 = arith.constant 0 : index
    %0 = vector.load %arg2[%c0, %c0_0] : memref<8x128xf32, #tpu.memory_space<vmem>>, vector<8x128xf32>
    %c0_1 = arith.constant 0 : index
    %c0_2 = arith.constant 0 : index
    %1 = vector.load %arg3[%c0_1, %c0_2] : memref<1x128xf32, #tpu.memory_space<vmem>>, vector<1x128xf32>
    %2 = vector.broadcast %1 : vector<1x128xf32> to vector<8x128xf32>
    %3 = arith.addf %0, %2 : vector<8x128xf32>
    %c0_3 = arith.constant 0 : index
    %c0_4 = arith.constant 0 : index
    %4 = vector.load %arg5[%c0_3, %c0_4] : memref<128x128xf32, #tpu.memory_space<vmem>>, vector<128x128xf32>
    %cst = arith.constant dense<0.000000e+00> : vector<8x128xf32>
    %5 = tpu.matmul %3, %4, %cst {dimension_numbers = #tpu.dot_dimension_numbers<[1], [0], [0], [1], [0, 0, 1, 1], [], []>} : vector<8x128xf32>, vector<128x128xf32>, vector<8x128xf32> -> vector<8x128xf32>
    %c0_5 = arith.constant 0 : index
    %c0_6 = arith.constant 0 : index
    %6 = vector.load %arg4[%c0_5, %c0_6] : memref<128x128xf32, #tpu.memory_space<vmem>>, vector<128x128xf32>
    %c0_7 = arith.constant 0 : index
    %c0_8 = arith.constant 0 : index
    %7 = vector.load %arg1[%c0_7, %c0_8] : memref<8x128xf32, #tpu.memory_space<vmem>>, vector<8x128xf32>
    %c0_i32 = arith.constant 0 : i32
    %cst_9 = arith.constant dense<0.000000e+00> : vector<8x128xf32>
    %8 = tpu.matmul %7, %6, %cst_9 {dimension_numbers = #tpu.dot_dimension_numbers<[1], [0], [0], [1], [0, 0, 1, 1], [], []>} : vector<8x128xf32>, vector<128x128xf32>, vector<8x128xf32> -> vector<8x128xf32>
    %9 = arith.addf %8, %5 : vector<8x128xf32>
    %c0_10 = arith.constant 0 : index
    %c0_11 = arith.constant 0 : index
    %10 = vector.load %arg6[%c0_10, %c0_11] : memref<8x128xf32, #tpu.memory_space<vmem>>, vector<8x128xf32>
    tpu.vector_store %arg6[%c0_10, %c0_11], %9 {strides = array<i32>} : memref<8x128xf32, #tpu.memory_space<vmem>>, vector<8x128xf32>,
    return
  }
  func.func @transform_0(%arg0: i32) -> (i32, i32) {
    %c0_i32 = arith.constant 0 : i32
    %c0_i32_0 = arith.constant 0 : i32
    return %arg0, %c0_i32 : i32, i32
  }
  func.func @transform_1(%arg0: i32) -> (i32, i32) {
    %c0_i32 = arith.constant 0 : i32
    %c0_i32_0 = arith.constant 0 : i32
    return %arg0, %c0_i32 : i32, i32
  }
  func.func @transform_2(%arg0: i32) -> (i32, i32) {
    %c0_i32 = arith.constant 0 : i32
    %c0_i32_0 = arith.constant 0 : i32
    %c0_i32_1 = arith.constant 0 : i32
    return %c0_i32, %c0_i32_0 : i32, i32
  }
  func.func @transform_3(%arg0: i32) -> (i32, i32) {
    %c0_i32 = arith.constant 0 : i32
    %c0_i32_0 = arith.constant 0 : i32
    %c0_i32_1 = arith.constant 0 : i32
    return %c0_i32, %c0_i32_0 : i32, i32
  }
  func.func @transform_4(%arg0: i32) -> (i32, i32) {
    %c0_i32 = arith.constant 0 : i32
    %c0_i32_0 = arith.constant 0 : i32
    %c0_i32_1 = arith.constant 0 : i32
    return %c0_i32, %c0_i32_0 : i32, i32
  }
  func.func @transform_5(%arg0: i32) -> (i32, i32) {
    %c0_i32 = arith.constant 0 : i32
    %c0_i32_0 = arith.constant 0 : i32
    return %arg0, %c0_i32 : i32, i32
  }
}

</mosaic_0001>

<llo_original>
// kernel: rk4_affine_steps.1
$region0: #{rk4_affine_steps.1}
  #allocation0 [shape = 'u32[]', space=smem, size = 0x4, offset = 0x4, fixed_abs, tag = 'smem constant byte address 0x4 - core index']
  #allocation1 [shape = 'u32[144,128]{1,0:T(1,128)}', space=vmem, size = 0x12000, scoped, tag = 'internal scratch']
  %s0 = inlined_call_operand.vmem [shape: f32[8,128], index: 0, kind: input, shape index: {}]
  %s1 = inlined_call_operand.vmem [shape: f32[8,128], index: 1, kind: input, shape index: {}]
  %s2 = inlined_call_operand.vmem [shape: f32[1,128], index: 2, kind: input, shape index: {}]
  %s3 = inlined_call_operand.vmem [shape: f32[128,128], index: 3, kind: input, shape index: {}]
  %s4 = inlined_call_operand.vmem [shape: f32[128,128], index: 4, kind: input, shape index: {}]
  %s5 = inlined_call_operand.hbm [shape: f32[8,128], index: 5, kind: output, shape index: {}]
  %s6 = sld [smem:[#allocation0]]
  $region30: #{rk4_affine_steps.1} parent=0
    _
  %s8 = ssub.s32 1, %s6
  %s9 = scalar_select 0, %s8, %s6
  $region1: #{rk4_affine_steps.1} parent=0
    #allocation2 [shape = 'u8[4096]{0}', space=vmem, size = 0x1000, scoped, tag = 'output window, operand 0, single buffered']
    #allocation3 [shape = 's32[1]{0}', space=sflag, size = 0x4, scoped, tag = 'scoped memory for rk4_affine_steps.1']
    %10 = vsyncpa [#allocation3], 0
    // Predicated region
    $region2: #{rk4_affine_steps.1} parent=1 // pred_check
      _
    $region3: #{rk4_affine_steps.1} parent=1 // pred_check_branch
      %12 = sbr.rel (0) target = $region5
    $region4: #{rk4_affine_steps.1} parent=1 // pred_region
      _
    $region5: #{rk4_affine_steps.1} parent=1 // pred_fallthru
      _
    // Predicated region
    $region6: #{rk4_affine_steps.1} parent=1 // pred_check
      _
    $region7: #{rk4_affine_steps.1} parent=1 // pred_check_branch
      %14 = sbr.rel (0) target = $region9
    $region8: #{rk4_affine_steps.1} parent=1 // pred_region
      _
    $region9: #{rk4_affine_steps.1} parent=1 // pred_fallthru
      _
    // Predicated region
    $region10: #{rk4_affine_steps.1} parent=1 // pred_check
      _
    $region11: #{rk4_affine_steps.1} parent=1 // pred_check_branch
      %16 = sbr.rel (0) target = $region13
    $region12: #{rk4_affine_steps.1} parent=1 // pred_region
      _
    $region13: #{rk4_affine_steps.1} parent=1 // pred_fallthru
      _
    // Predicated region
    $region14: #{rk4_affine_steps.1} parent=1 // pred_check
      _
    $region15: #{rk4_affine_steps.1} parent=1 // pred_check_branch
      %18 = sbr.rel (0) target = $region17
    $region16: #{rk4_affine_steps.1} parent=1 // pred_region
      _
    $region17: #{rk4_affine_steps.1} parent=1 // pred_fallthru
      _
    // Predicated region
    $region18: #{rk4_affine_steps.1} parent=1 // pred_check
      _
    $region19: #{rk4_affine_steps.1} parent=1 // pred_check_branch
      %20 = sbr.rel (0) target = $region21
    $region20: #{rk4_affine_steps.1} parent=1 // pred_region
      _
    $region21: #{rk4_affine_steps.1} parent=1 // pred_fallthru
      _
    %v21 = vld [vmem:[%s1] sm:$0xff]
    %v22 = vld [vmem:[%s2] sm:$0x1]
    %v24 = vlaneseq
    %v25 = vshrl.u32 %v24, 7
    %v26 = vsub.s32 0, %v25
    %v27 = vrot.slane %v22, %v26
    %v29 = vadd.f32 %v21, %v27
    %v30 = vld [vmem:[%s4] sm:$0xff]
    %v31 = vld [vmem:[%s4 + $0x8] sm:$0xff]
    %v32 = vld [vmem:[%s4 + $0x10] sm:$0xff]
    %v33 = vld [vmem:[%s4 + $0x18] sm:$0xff]
    %v34 = vld [vmem:[%s4 + $0x20] sm:$0xff]
    %v35 = vld [vmem:[%s4 + $0x28] sm:$0xff]
    %v36 = vld [vmem:[%s4 + $0x30] sm:$0xff]
    %v37 = vld [vmem:[%s4 + $0x38] sm:$0xff]
    %v38 = vld [vmem:[%s4 + $0x40] sm:$0xff]
    %v39 = vld [vmem:[%s4 + $0x48] sm:$0xff]
    %v40 = vld [vmem:[%s4 + $0x50] sm:$0xff]
    %v41 = vld [vmem:[%s4 + $0x58] sm:$0xff]
    %v42 = vld [vmem:[%s4 + $0x60] sm:$0xff]
    %v43 = vld [vmem:[%s4 + $0x68] sm:$0xff]
    %v44 = vld [vmem:[%s4 + $0x70] sm:$0xff]
    %v45 = vld [vmem:[%s4 + $0x78] sm:$0xff]
    %46 = vmatprep.subr.mxu0 0.0
    %47 = vmatpush1.msra.mxu0 %v45
    %48 = vmatprep.subr.mxu0 0.0
    %49 = vmatpush1.msra.mxu0 %v44
    %50 = vmatprep.subr.mxu0 0.0
    %51 = vmatpush1.msra.mxu0 %v43
    %52 = vmatprep.subr.mxu0 0.0
    %53 = vmatpush1.msra.mxu0 %v42
    %54 = vmatprep.subr.mxu0 0.0
    %55 = vmatpush1.msra.mxu0 %v41
    %56 = vmatprep.subr.mxu0 0.0
    %57 = vmatpush1.msra.mxu0 %v40
    %58 = vmatprep.subr.mxu0 0.0
    %59 = vmatpush1.msra.mxu0 %v39
    %60 = vmatprep.subr.mxu0 0.0
    %61 = vmatpush1.msra.mxu0 %v38
    %62 = vmatprep.subr.mxu0 0.0
    %63 = vmatpush1.msra.mxu0 %v37
    %64 = vmatprep.subr.mxu0 0.0
    %65 = vmatpush1.msra.mxu0 %v36
    %66 = vmatprep.subr.mxu0 0.0
    %67 = vmatpush1.msra.mxu0 %v35
    %68 = vmatprep.subr.mxu0 0.0
    %69 = vmatpush1.msra.mxu0 %v34
    %70 = vmatprep.subr.mxu0 0.0
    %71 = vmatpush1.msra.mxu0 %v33
    %72 = vmatprep.subr.mxu0 0.0
    %73 = vmatpush1.msra.mxu0 %v32
    %74 = vmatprep.subr.mxu0 0.0
    %75 = vmatpush1.msra.mxu0 %v31
    %76 = vmatprep.subr.mxu0 0.0
    %77 = vmatpush1.msra.mxu0 %v30
    %78 = vmatprep.subr.mxu0 0.0
    %79 = vmatpush2.msra.mxu0 0.0
    %80 = vmatprep.subr.mxu0 0.0
    %81 = vmatpush2.msra.mxu0 0.0
    %82 = vmatprep.subr.mxu0 0.0
    %83 = vmatpush2.msra.mxu0 0.0
    %84 = vmatprep.subr.mxu0 0.0
    %85 = vmatpush2.msra.mxu0 0.0
    %86 = vmatprep.subr.mxu0 0.0
    %87 = vmatpush2.msra.mxu0 0.0
    %88 = vmatprep.subr.mxu0 0.0
    %89 = vmatpush2.msra.mxu0 0.0
    %90 = vmatprep.subr.mxu0 0.0
    %91 = vmatpush2.msra.mxu0 0.0
    %92 = vmatprep.subr.mxu0 0.0
    %93 = vmatpush2.msra.mxu0 0.0
    %94 = vmatprep.subr.mxu0 0.0
    %95 = vmatpush2.msra.mxu0 0.0
    %96 = vmatprep.subr.mxu0 0.0
    %97 = vmatpush2.msra.mxu0 0.0
    %98 = vmatprep.subr.mxu0 0.0
    %99 = vmatpush2.msra.mxu0 0.0
    %100 = vmatprep.subr.mxu0 0.0
    %101 = vmatpush2.msra.mxu0 0.0
    %102 = vmatprep.subr.mxu0 0.0
    %103 = vmatpush2.msra.mxu0 0.0
    %104 = vmatprep.subr.mxu0 0.0
    %105 = vmatpush2.msra.mxu0 0.0
    %106 = vmatprep.subr.mxu0 0.0
    %107 = vmatpush2.msra.mxu0 0.0
    %108 = vmatprep.subr.mxu0 0.0
    %109 = vmatpush2.msra.mxu0 0.0
    %110 = vmatprep.mubr.f32.mxu0 0.0
    %111 = vmatmul.mubr.f32.gmra.mxu0 %v29
    %v112 = vpop.f32.mrf.mxu0
    %v113 = vadd.f32 0.0, %v112
    %v114 = vpop.f32.mrf.mxu0
    %115 = vdwg.mxu0
    %v116 = vld [vmem:[%s3] sm:$0xff]
    %v117 = vld [vmem:[%s3 + $0x8] sm:$0xff]
    %v118 = vld [vmem:[%s3 + $0x10] sm:$0xff]
    %v119 = vld [vmem:[%s3 + $0x18] sm:$0xff]
    %v120 = vld [vmem:[%s3 + $0x20] sm:$0xff]
    %v121 = vld [vmem:[%s3 + $0x28] sm:$0xff]
    %v122 = vld [vmem:[%s3 + $0x30] sm:$0xff]
    %v123 = vld [vmem:[%s3 + $0x38] sm:$0xff]
    %v124 = vld [vmem:[%s3 + $0x40] sm:$0xff]
    %v125 = vld [vmem:[%s3 + $0x48] sm:$0xff]
    %v126 = vld [vmem:[%s3 + $0x50] sm:$0xff]
    %v127 = vld [vmem:[%s3 + $0x58] sm:$0xff]
    %v128 = vld [vmem:[%s3 + $0x60] sm:$0xff]
    %v129 = vld [vmem:[%s3 + $0x68] sm:$0xff]
    %v130 = vld [vmem:[%s3 + $0x70] sm:$0xff]
    %v131 = vld [vmem:[%s3 + $0x78] sm:$0xff]
    %v132 = vld [vmem:[%s0] sm:$0xff]
    %133 = vmatprep.subr.mxu0 0.0
    %134 = vmatpush1.msra.mxu0 %v131
    %135 = vmatprep.subr.mxu0 0.0
    %136 = vmatpush1.msra.mxu0 %v130
    %137 = vmatprep.subr.mxu0 0.0
    %138 = vmatpush1.msra.mxu0 %v129
    %139 = vmatprep.subr.mxu0 0.0
    %140 = vmatpush1.msra.mxu0 %v128
    %141 = vmatprep.subr.mxu0 0.0
    %142 = vmatpush1.msra.mxu0 %v127
    %143 = vmatprep.subr.mxu0 0.0
    %144 = vmatpush1.msra.mxu0 %v126
    %145 = vmatprep.subr.mxu0 0.0
    %146 = vmatpush1.msra.mxu0 %v125
    %147 = vmatprep.subr.mxu0 0.0
    %148 = vmatpush1.msra.mxu0 %v124
    %149 = vmatprep.subr.mxu0 0.0
    %150 = vmatpush1.msra.mxu0 %v123
    %151 = vmatprep.subr.mxu0 0.0
    %152 = vmatpush1.msra.mxu0 %v122
    %153 = vmatprep.subr.mxu0 0.0
    %154 = vmatpush1.msra.mxu0 %v121
    %155 = vmatprep.subr.mxu0 0.0
    %156 = vmatpush1.msra.mxu0 %v120
    %157 = vmatprep.subr.mxu0 0.0
    %158 = vmatpush1.msra.mxu0 %v119
    %159 = vmatprep.subr.mxu0 0.0
    %160 = vmatpush1.msra.mxu0 %v118
    %161 = vmatprep.subr.mxu0 0.0
    %162 = vmatpush1.msra.mxu0 %v117
    %163 = vmatprep.subr.mxu0 0.0
    %164 = vmatpush1.msra.mxu0 %v116
    %165 = vmatprep.subr.mxu0 0.0
    %166 = vmatpush2.msra.mxu0 0.0
    %167 = vmatprep.subr.mxu0 0.0
    %168 = vmatpush2.msra.mxu0 0.0
    %169 = vmatprep.subr.mxu0 0.0
    %170 = vmatpush2.msra.mxu0 0.0
    %171 = vmatprep.subr.mxu0 0.0
    %172 = vmatpush2.msra.mxu0 0.0
    %173 = vmatprep.subr.mxu0 0.0
    %174 = vmatpush2.msra.mxu0 0.0
    %175 = vmatprep.subr.mxu0 0.0
    %176 = vmatpush2.msra.mxu0 0.0
    %177 = vmatprep.subr.mxu0 0.0
    %178 = vmatpush2.msra.mxu0 0.0
    %179 = vmatprep.subr.mxu0 0.0
    %180 = vmatpush2.msra.mxu0 0.0
    %181 = vmatprep.subr.mxu0 0.0
    %182 = vmatpush2.msra.mxu0 0.0
    %183 = vmatprep.subr.mxu0 0.0
    %184 = vmatpush2.msra.mxu0 0.0
    %185 = vmatprep.subr.mxu0 0.0
    %186 = vmatpush2.msra.mxu0 0.0
    %187 = vmatprep.subr.mxu0 0.0
    %188 = vmatpush2.msra.mxu0 0.0
    %189 = vmatprep.subr.mxu0 0.0
    %190 = vmatpush2.msra.mxu0 0.0
    %191 = vmatprep.subr.mxu0 0.0
    %192 = vmatpush2.msra.mxu0 0.0
    %193 = vmatprep.subr.mxu0 0.0
    %194 = vmatpush2.msra.mxu0 0.0
    %195 = vmatprep.subr.mxu0 0.0
    %196 = vmatpush2.msra.mxu0 0.0
    %197 = vmatprep.mubr.f32.mxu0 0.0
    %198 = vmatmul.mubr.f32.gmra.mxu0 %v132
    %v199 = vpop.f32.mrf.mxu0
    %v200 = vadd.f32 %v113, %v199
    %v201 = vpop.f32.mrf.mxu0
    %202 = vdwg.mxu0
    %203 = vst [vmem:[#allocation2] sm:$0xff] %v200
    // Predicated region
    $region22: #{rk4_affine_steps.1} parent=1 // pred_check
      _
    $region23: #{rk4_affine_steps.1} parent=1 // pred_check_branch
      %205 = sbr.rel (0) target = $region25
    $region24: #{rk4_affine_steps.1} parent=1 // pred_region
      %s207 = ssub.s32 128, 128
      %208 = vsyncadd [#allocation3], %s207
      %s210 = sshll.u32 [#allocation2], 4
      %s211 = int_to_ptr.vmem [resolvable:$true] %s210
      %213 = dma.vmem_to_hbm [thread:$0]  %s211, 128, %s5, [#allocation3]
    $region25: #{rk4_affine_steps.1} parent=1 // pred_fallthru
      _
    // Predicated region
    $region26: #{rk4_affine_steps.1} parent=1 // pred_check
      _
    $region27: #{rk4_affine_steps.1} parent=1 // pred_check_branch
      %215 = sbr.rel (0) target = $region29
    $region28: #{rk4_affine_steps.1} parent=1 // pred_region
      %216 = dma.done [#allocation3], 128
    $region29: #{rk4_affine_steps.1} parent=1 // pred_fallthru
      _
    %217 = vsyncpa [#allocation3], 1

</llo_original>
